<compile_context>
chip_gen: v6e
topology: v6e:2x2x1
jax: 0.10.0
libtpu: 0.0.40
codegen_flags: <defaults>
</compile_context>

<pallas_src>
import numpy as np

import jax
import jax.numpy as jnp
from jax.experimental import pallas as pl
from jax.experimental.pallas import tpu as pltpu


# ----------------------------------------------------------------------------
# Pallas kernel: fused elementwise YOLO box decode for all scales
# ----------------------------------------------------------------------------
def _decode_kernel(p_ref, aux_ref, o_ref):
    # p_ref:   (B, R, TN)  raw predictions, conv layout, lanes = grid cells
    # aux_ref: (3, R, TN)  packed [add, mul, sel] slab
    # o_ref:   (B, R, TN)  decoded predictions
    p = p_ref[...]
    aux = aux_ref[...]
    add = aux[0][None, :, :]
    mul = aux[1][None, :, :]
    sel = aux[2][None, :, :]

    sig = jax.nn.sigmoid(p)          # xy / objectness / class rows
    ex = jnp.exp(p)                  # wh rows (unselected infs are discarded)

    # Single full-tile (unmasked) store.
    o_ref[...] = jnp.where(sel > 0.5, ex, sig) * mul + add


# ----------------------------------------------------------------------------
# Aux slab construction (compile-time constants, built with numpy)
# ----------------------------------------------------------------------------
def _build_aux(scales, attrs, n_pad):
    # scales: list of (G, stride, anchors); same number of anchors per scale.
    add_cols, mul_cols, sel_cols = [], [], []
    for G, stride, anchors in scales:
        A = len(anchors)
        n = G * G
        gg = np.arange(n)
        gx = (gg % G).astype(np.float32)
        gy = (gg // G).astype(np.float32)
        add = np.zeros((A * attrs, n), np.float32)
        mul = np.ones((A * attrs, n), np.float32)
        sel = np.zeros((A * attrs, n), np.float32)
        for a in range(A):
            r0 = a * attrs
            add[r0 + 0] = gx * float(stride)
            add[r0 + 1] = gy * float(stride)
            mul[r0 + 0] = float(stride)
            mul[r0 + 1] = float(stride)
            mul[r0 + 2] = float(anchors[a][0])   # (anchor/stride)*stride folded
            mul[r0 + 3] = float(anchors[a][1])
            sel[r0 + 2] = 1.0
            sel[r0 + 3] = 1.0
        add_cols.append(add)
        mul_cols.append(mul)
        sel_cols.append(sel)

    add = np.concatenate(add_cols, axis=1)
    mul = np.concatenate(mul_cols, axis=1)
    sel = np.concatenate(sel_cols, axis=1)
    pad = n_pad - add.shape[1]
    add = np.pad(add, ((0, 0), (0, pad)))
    mul = np.pad(mul, ((0, 0), (0, pad)), constant_values=1.0)
    sel = np.pad(sel, ((0, 0), (0, pad)))
    return jnp.asarray(np.stack([add, mul, sel], axis=0))   # (3, R, Npad)


# ----------------------------------------------------------------------------
# Fused DetectionLayer forward
# ----------------------------------------------------------------------------
def detection_forward_pallas(feats, input_dim, anchors_per_scale, num_classes):
    attrs = 5 + num_classes
    A = len(anchors_per_scale[0])
    R = A * attrs
    B = feats[0].shape[0]

    scales, slabs, n_per_scale = [], [], []
    for f, anchors in zip(feats, anchors_per_scale):
        Bf, C, G, G2 = f.shape
        assert Bf == B and G == G2 and C == R and len(anchors) == A
        stride = input_dim // G
        scales.append((G, stride, anchors))
        slabs.append(f.reshape(B, R, G * G).astype(jnp.float32))  # free reshape
        n_per_scale.append(G * G)

    n_tot = sum(n_per_scale)
    LANE = 128
    tn = min(512, ((n_tot + LANE - 1) // LANE) * LANE)   # lane-aligned block width
    n_pad = ((n_tot + tn - 1) // tn) * tn
    num_tiles = n_pad // tn

    aux = _build_aux(scales, attrs, n_pad)                       # (3, R, Npad)
    p = jnp.concatenate(slabs, axis=2)                           # (B, R, Ntot)
    p = jnp.pad(p, ((0, 0), (0, 0), (0, n_pad - n_tot)))         # (B, R, Npad)

    out = pl.pallas_call(
        _decode_kernel,
        out_shape=jax.ShapeDtypeStruct((B, R, n_pad), jnp.float32),
        grid=(num_tiles,),
        in_specs=[
            pl.BlockSpec((B, R, tn), lambda t: (0, 0, t)),
            pl.BlockSpec((3, R, tn), lambda t: (0, 0, t)),
        ],
        out_specs=pl.BlockSpec((B, R, tn), lambda t: (0, 0, t)),
        compiler_params=pltpu.CompilerParams(
            dimension_semantics=("parallel",)
        ),
    )(p, aux)

    # Single layout pass on the (already decoded) data: conv layout -> (B, N, attrs)
    parts, off = [], 0
    for (G, stride, anchors), n in zip(scales, n_per_scale):
        o = out[:, :, off:off + n]                       # (B, A*attrs, G*G)
        o = o.reshape(B, A, attrs, n)
        o = jnp.transpose(o, (0, 3, 1, 2)).reshape(B, n * A, attrs)
        parts.append(o)
        off += n
    return jnp.concatenate(parts, axis=1)                # (B, sum(G*G*A), attrs)


class DetectionLayer:
    """JAX/Pallas equivalent of the PyTorch DetectionLayer (inference decode)."""

    def __init__(self, anchors, input_dim, num_classes):
        self.anchors = anchors          # 3 anchor sets, one per scale
        self.input_dim = input_dim
        self.num_classes = num_classes

    def __call__(self, x, y, z):
        # torch's .data detach has no autodiff meaning here (pure forward).
        return detection_forward_pallas(
            (x, y, z), self.input_dim, self.anchors, self.num_classes
        )


# ----------------------------------------------------------------------------
# Pure-JAX reference (mirrors the torch predict_transform) for validation
# ----------------------------------------------------------------------------
def _predict_transform_ref(x, input_dim, anchors, num_classes):
    B, C, G, _ = x.shape
    stride = input_dim // G
    attrs = 5 + num_classes
    A = len(anchors)
    N = G * G * A
    p = x.reshape(B, A * attrs, G * G).transpose(0, 2, 1).reshape(B, N, attrs)
    p = p.astype(jnp.float32)

    gx, gy = jnp.meshgrid(
        jnp.arange(G, dtype=jnp.float32), jnp.arange(G, dtype=jnp.float32)
    )
    xy = jnp.stack([gx.reshape(-1), gy.reshape(-1)], axis=1)
    xy = jnp.tile(xy, (1, A)).reshape(-1, 2)[None]                 # (1, N, 2)
    anc = jnp.asarray(anchors, dtype=jnp.float32) / float(stride)
    anc = jnp.tile(anc, (G * G, 1))[None]                          # (1, N, 2)

    box_xy = (jax.nn.sigmoid(p[:, :, 0:2]) + xy) * stride
    box_wh = (jnp.exp(p[:, :, 2:4]) * anc) * stride
    rest = jax.nn.sigmoid(p[:, :, 4:])
    return jnp.concatenate([box_xy, box_wh, rest], axis=-1)


if __name__ == "__main__":
    # Deterministic configuration (module has no learnable parameters).
    num_classes = 3                     # attrs = 5 + 3 = 8
    input_dim = 32
    anchors = [
        [(10.0, 13.0), (16.0, 30.0), (33.0, 23.0)],        # scale 0 (stride 4)
        [(30.0, 61.0), (62.0, 45.0), (59.0, 119.0)],       # scale 1 (stride 8)
        [(116.0, 90.0), (156.0, 198.0), (373.0, 326.0)],   # scale 2 (stride 16)
    ]
    A = 3
    attrs = 5 + num_classes
    B = 2

    key = jax.random.PRNGKey(0)
    kx, ky, kz = jax.random.split(key, 3)
    x = jax.random.normal(kx, (B, A * attrs, 8, 8), dtype=jnp.float32)
    y = jax.random.normal(ky, (B, A * attrs, 4, 4), dtype=jnp.float32)
    z = jax.random.normal(kz, (B, A * attrs, 2, 2), dtype=jnp.float32)

    layer = DetectionLayer(anchors, input_dim, num_classes)
    fwd = jax.jit(lambda a, b, c: layer(a, b, c))
    out = jax.block_until_ready(fwd(x, y, z))

    # Validate against the pure-JAX mirror of the torch code.
    ref = jnp.concatenate(
        [
            _predict_transform_ref(x, input_dim, anchors[0], num_classes),
            _predict_transform_ref(y, input_dim, anchors[1], num_classes),
            _predict_transform_ref(z, input_dim, anchors[2], num_classes),
        ],
        axis=1,
    )
    assert out.shape == (B, (8 * 8 + 4 * 4 + 2 * 2) * A, attrs), out.shape
    assert jnp.allclose(out, ref, atol=1e-4, rtol=1e-5), float(
        jnp.max(jnp.abs(out - ref))
    )

    print("KERNEL_OK")
</pallas_src>

<mosaic_0001>
module attributes {stable_mosaic.version = 11 : i64} {
  func.func @_decode_kernel(%arg0: i32, %arg1: memref<2x24x128xf32, #tpu.memory_space<vmem>>, %arg2: memref<3x24x128xf32, #tpu.memory_space<vmem>>, %arg3: memref<2x24x128xf32, #tpu.memory_space<vmem>>) attributes {dimension_semantics = [#tpu.dimension_semantics<parallel>], iteration_bounds = array<i64: 1>, scalar_prefetch = 0 : i64, scratch_operands = 0 : i64, tpu.core_type = #tpu.core_type<tc>, window_params = [{transform_indices = @transform_0, window_bounds = array<i64: 2, 24, 128>}, {transform_indices = @transform_1, window_bounds = array<i64: 3, 24, 128>}, {transform_indices = @transform_2, window_bounds = array<i64: 2, 24, 128>}]} {
    %c0 = arith.constant 0 : index
    %c0_0 = arith.constant 0 : index
    %c0_1 = arith.constant 0 : index
    %0 = vector.load %arg1[%c0, %c0_0, %c0_1] : memref<2x24x128xf32, #tpu.memory_space<vmem>>, vector<2x24x128xf32>
    %c0_2 = arith.constant 0 : index
    %c0_3 = arith.constant 0 : index
    %c0_4 = arith.constant 0 : index
    %1 = vector.load %arg2[%c0_2, %c0_3, %c0_4] : memref<3x24x128xf32, #tpu.memory_space<vmem>>, vector<3x24x128xf32>
    %2 = vector.extract_strided_slice %1 {offsets = [0, 0, 0], sizes = [1, 24, 128], strides = [1, 1, 1]} : vector<3x24x128xf32> to vector<1x24x128xf32>
    %3 = vector.shape_cast %2 : vector<1x24x128xf32> to vector<24x128xf32>
    %4 = vector.shape_cast %3 : vector<24x128xf32> to vector<1x24x128xf32>
    %5 = vector.extract_strided_slice %1 {offsets = [1, 0, 0], sizes = [1, 24, 128], strides = [1, 1, 1]} : vector<3x24x128xf32> to vector<1x24x128xf32>
    %6 = vector.shape_cast %5 : vector<1x24x128xf32> to vector<24x128xf32>
    %7 = vector.shape_cast %6 : vector<24x128xf32> to vector<1x24x128xf32>
    %8 = vector.extract_strided_slice %1 {offsets = [2, 0, 0], sizes = [1, 24, 128], strides = [1, 1, 1]} : vector<3x24x128xf32> to vector<1x24x128xf32>
    %9 = vector.shape_cast %8 : vector<1x24x128xf32> to vector<24x128xf32>
    %10 = vector.shape_cast %9 : vector<24x128xf32> to vector<1x24x128xf32>
    %11 = arith.negf %0 : vector<2x24x128xf32>
    %12 = math.exp %11 : vector<2x24x128xf32>
    %cst = arith.constant 1.000000e+00 : f32
    %13 = vector.broadcast %cst : f32 to vector<2x24x128xf32>
    %14 = arith.addf %13, %12 : vector<2x24x128xf32>
    %15 = arith.divf %13, %14 : vector<2x24x128xf32>
    %16 = math.exp %0 : vector<2x24x128xf32>
    %cst_5 = arith.constant 5.000000e-01 : f32
    %17 = vector.broadcast %cst_5 : f32 to vector<1x24x128xf32>
    %18 = arith.cmpf ogt, %10, %17 : vector<1x24x128xf32>
    %19 = vector.shape_cast %18 : vector<1x24x128xi1> to vector<1x24x128xi1>
    %20 = vector.broadcast %19 : vector<1x24x128xi1> to vector<2x24x128xi1>
    %21 = arith.select %20, %16, %15 : vector<2x24x128xi1>, vector<2x24x128xf32>
    %22 = vector.broadcast %7 : vector<1x24x128xf32> to vector<2x24x128xf32>
    %23 = arith.mulf %21, %22 : vector<2x24x128xf32>
    %24 = vector.broadcast %4 : vector<1x24x128xf32> to vector<2x24x128xf32>
    %25 = arith.addf %23, %24 : vector<2x24x128xf32>
    %c0_6 = arith.constant 0 : index
    %c0_7 = arith.constant 0 : index
    %c0_8 = arith.constant 0 : index
    %26 = vector.load %arg3[%c0_6, %c0_7, %c0_8] : memref<2x24x128xf32, #tpu.memory_space<vmem>>, vector<2x24x128xf32>
    tpu.vector_store %arg3[%c0_6, %c0_7, %c0_8], %25 {strides = array<i32>} : memref<2x24x128xf32, #tpu.memory_space<vmem>>, vector<2x24x128xf32>,
    return
  }
  func.func @transform_0(%arg0: i32) -> (i32, i32, i32) {
    %c0_i32 = arith.constant 0 : i32
    %c0_i32_0 = arith.constant 0 : i32
    %c0_i32_1 = arith.constant 0 : i32
    return %c0_i32, %c0_i32_0, %arg0 : i32, i32, i32
  }
  func.func @transform_1(%arg0: i32) -> (i32, i32, i32) {
    %c0_i32 = arith.constant 0 : i32
    %c0_i32_0 = arith.constant 0 : i32
    %c0_i32_1 = arith.constant 0 : i32
    return %c0_i32, %c0_i32_0, %arg0 : i32, i32, i32
  }
  func.func @transform_2(%arg0: i32) -> (i32, i32, i32) {
    %c0_i32 = arith.constant 0 : i32
    %c0_i32_0 = arith.constant 0 : i32
    %c0_i32_1 = arith.constant 0 : i32
    return %c0_i32, %c0_i32_0, %arg0 : i32, i32, i32
  }
}

</mosaic_0001>

<llo_original>
// kernel: _lambda_.1
$region0: #{_lambda_.1}
  #allocation0 [shape = 'u32[]', space=smem, size = 0x4, offset = 0x4, fixed_abs, tag = 'smem constant byte address 0x4 - core index']
  #allocation1 [shape = 'u32[144,128]{1,0:T(1,128)}', space=vmem, size = 0x12000, scoped, tag = 'internal scratch']
  %s0 = inlined_call_operand.vmem [shape: f32[2,24,128], index: 0, kind: input, shape index: {}]
  %s1 = inlined_call_operand.vmem [shape: f32[3,24,128], index: 1, kind: input, shape index: {}]
  %s2 = inlined_call_operand.vmem [shape: f32[2,24,128], index: 2, kind: output, shape index: {}]
  %s3 = sld [smem:[#allocation0]]
  $region18: #{_lambda_.1} parent=0
    _
  %s5 = ssub.s32 1, %s3
  %s6 = scalar_select 0, %s5, %s3
  // Predicated region
  $region2: #{_lambda_.1} parent=0 // pred_check
    _
  $region3: #{_lambda_.1} parent=0 // pred_check_branch
    %8 = sbr.rel (0) target = $region5
  $region4: #{_lambda_.1} parent=0 // pred_region
    _
  $region5: #{_lambda_.1} parent=0 // pred_fallthru
    _
  // Predicated region
  $region6: #{_lambda_.1} parent=0 // pred_check
    _
  $region7: #{_lambda_.1} parent=0 // pred_check_branch
    %10 = sbr.rel (0) target = $region9
  $region8: #{_lambda_.1} parent=0 // pred_region
    _
  $region9: #{_lambda_.1} parent=0 // pred_fallthru
    _
  %v11 = vld [vmem:[%s0] sm:$0xff]
  %v12 = vld [vmem:[%s0 + $0x8] sm:$0xff]
  %v13 = vld [vmem:[%s0 + $0x10] sm:$0xff]
  %v14 = vld [vmem:[%s0 + $0x18] sm:$0xff]
  %v15 = vld [vmem:[%s0 + $0x20] sm:$0xff]
  %v16 = vld [vmem:[%s0 + $0x28] sm:$0xff]
  %v17 = vld [vmem:[%s1] sm:$0xff]
  %v18 = vld [vmem:[%s1 + $0x8] sm:$0xff]
  %v19 = vld [vmem:[%s1 + $0x10] sm:$0xff]
  %v20 = vld [vmem:[%s1 + $0x18] sm:$0xff]
  %v21 = vld [vmem:[%s1 + $0x20] sm:$0xff]
  %v22 = vld [vmem:[%s1 + $0x28] sm:$0xff]
  %v23 = vld [vmem:[%s1 + $0x30] sm:$0xff]
  %v24 = vld [vmem:[%s1 + $0x38] sm:$0xff]
  %v25 = vld [vmem:[%s1 + $0x40] sm:$0xff]
  %v26 = vxor.u32 %v11, 2147483648
  %v27 = vxor.u32 %v12, 2147483648
  %v28 = vxor.u32 %v13, 2147483648
  %v29 = vxor.u32 %v14, 2147483648
  %v30 = vxor.u32 %v15, 2147483648
  %v31 = vxor.u32 %v16, 2147483648
  %v32 = vmul.f32 %v26, 1.442695
  %v33 = vpow.pop %v32
  %v34 = vmul.f32 %v27, 1.442695
  %v35 = vpow.pop %v34
  %v36 = vmul.f32 %v28, 1.442695
  %v37 = vpow.pop %v36
  %v38 = vmul.f32 %v29, 1.442695
  %v39 = vpow.pop %v38
  %v40 = vmul.f32 %v30, 1.442695
  %v41 = vpow.pop %v40
  %v42 = vmul.f32 %v31, 1.442695
  %v43 = vpow.pop %v42
  %v44 = vadd.f32 %v33, 1.0
  %v45 = vadd.f32 %v35, 1.0
  %v46 = vadd.f32 %v37, 1.0
  %v47 = vadd.f32 %v39, 1.0
  %v48 = vadd.f32 %v41, 1.0
  %v49 = vadd.f32 %v43, 1.0
  %v50 = vrcp.pop %v44
  %v51 = vmul.f32 1.0, %v50
  %v52 = vrcp.pop %v45
  %v53 = vmul.f32 1.0, %v52
  %v54 = vrcp.pop %v46
  %v55 = vmul.f32 1.0, %v54
  %v56 = vrcp.pop %v47
  %v57 = vmul.f32 1.0, %v56
  %v58 = vrcp.pop %v48
  %v59 = vmul.f32 1.0, %v58
  %v60 = vrcp.pop %v49
  %v61 = vmul.f32 1.0, %v60
  %v62 = vmul.f32 %v11, 1.442695
  %v63 = vpow.pop %v62
  %v64 = vmul.f32 %v12, 1.442695
  %v65 = vpow.pop %v64
  %v66 = vmul.f32 %v13, 1.442695
  %v67 = vpow.pop %v66
  %v68 = vmul.f32 %v14, 1.442695
  %v69 = vpow.pop %v68
  %v70 = vmul.f32 %v15, 1.442695
  %v71 = vpow.pop %v70
  %v72 = vmul.f32 %v16, 1.442695
  %v73 = vpow.pop %v72
  %vm74 = vcmp.gt.f32.partialorder %v23, 0.5
  %vm75 = vcmp.gt.f32.partialorder %v24, 0.5
  %vm76 = vcmp.gt.f32.partialorder %v25, 0.5
  %v77 = vsel %vm74, 1, 0
  %v78 = vsel %vm75, 1, 0
  %v79 = vsel %vm76, 1, 0
  %vm80 = vcmp.eq.s32.totalorder %v77, 1
  %vm81 = vcmp.eq.s32.totalorder %v78, 1
  %vm82 = vcmp.eq.s32.totalorder %v79, 1
  %v83 = vsel %vm80, %v63, %v51
  %v84 = vsel %vm81, %v65, %v53
  %v85 = vsel %vm82, %v67, %v55
  %v86 = vsel %vm80, %v69, %v57
  %v87 = vsel %vm81, %v71, %v59
  %v88 = vsel %vm82, %v73, %v61
  %v89 = vmul.f32 %v83, %v20
  %v90 = vmul.f32 %v84, %v21
  %v91 = vmul.f32 %v85, %v22
  %v92 = vmul.f32 %v86, %v20
  %v93 = vmul.f32 %v87, %v21
  %v94 = vmul.f32 %v88, %v22
  %v95 = vadd.f32 %v89, %v17
  %v96 = vadd.f32 %v90, %v18
  %v97 = vadd.f32 %v91, %v19
  %v98 = vadd.f32 %v92, %v17
  %v99 = vadd.f32 %v93, %v18
  %v100 = vadd.f32 %v94, %v19
  %101 = vst [vmem:[%s2] sm:$0xff] %v95
  %102 = vst [vmem:[%s2 + $0x8] sm:$0xff] %v96
  %103 = vst [vmem:[%s2 + $0x10] sm:$0xff] %v97
  %104 = vst [vmem:[%s2 + $0x18] sm:$0xff] %v98
  %105 = vst [vmem:[%s2 + $0x20] sm:$0xff] %v99
  %106 = vst [vmem:[%s2 + $0x28] sm:$0xff] %v100
  // Predicated region
  $region10: #{_lambda_.1} parent=0 // pred_check
    _
  $region11: #{_lambda_.1} parent=0 // pred_check_branch
    %108 = sbr.rel (0) target = $region13
  $region12: #{_lambda_.1} parent=0 // pred_region
    _
  $region13: #{_lambda_.1} parent=0 // pred_fallthru
    _
  // Predicated region
  $region14: #{_lambda_.1} parent=0 // pred_check
    _
  $region15: #{_lambda_.1} parent=0 // pred_check_branch
    %110 = sbr.rel (0) target = $region17
  $region16: #{_lambda_.1} parent=0 // pred_region
    _
  $region17: #{_lambda_.1} parent=0 // pred_fallthru
    _

</llo_original>
